<compile_context>
chip_gen: v7x
topology: tpu7x:2x2x1
jax: 0.10.0
libtpu: 0.0.40
codegen_flags: <defaults>
</compile_context>

<pallas_src>
import jax
import jax.numpy as jnp
from jax import lax
from jax.experimental import pallas as pl
from jax.experimental.pallas import tpu as pltpu


def _pick_batch_block(N, C, L,
                      target_bytes=2 * 1024 * 1024,   # ~2 MiB of x per grid step
                      max_fuse=32,                    # cap on static lane-fusion width
                      min_step_bytes=512 * 1024):     # never split below this for megacore
    """Batch elements fused into one lane-wide slab per grid step."""
    per_elem = C * L * 4  # f32 bytes of one (C, L) slice
    nb = max(1, min(N, max_fuse, target_bytes // max(per_elem, 1)))
    # Megacore: prefer >=2 parallel grid steps for v7x's two TensorCores, but
    # only if each step still amortizes the ~0.35us fixed step overhead.
    if nb == N and N > 1 and (N // 2) * per_elem >= min_step_bytes:
        nb = max(1, N // 2)
    return nb


def block_kernel(x_ref, w1_ref, b1_ref, w2f_ref, b2_ref, o_ref):
    Nb, C, L = x_ref.shape
    W = Nb * L

    # ---- hoisted per-block constants (once per grid step) ------------------
    w1 = w1_ref[...]                                    # (C, C)
    w2f = w2f_ref[...]                                  # (C, 3C) = [l-1 | l | l+1]
    b1 = jnp.broadcast_to(b1_ref[...], (C, W))          # materialize broadcast once
    b2 = jnp.broadcast_to(b2_ref[...], (C, W))

    # Periodic (1, W) lane masks: position within each length-L segment. They
    # zero the columns where the lane-wide roll would wrap across the zero
    # padding / across batch boundaries.
    lane = lax.broadcasted_iota(jnp.int32, (1, W), 1) % L
    keep_l = (lane > 0).astype(jnp.float32)             # kill wrap at l == 0
    keep_r = (lane < L - 1).astype(jnp.float32)         # kill wrap at l == L-1

    # ---- lane-fuse the Nb batch slices into one (C, Nb*L) slab -------------
    # (each (C, L) slice is a whole 128-lane group, so this is layout-cheap)
    x_wide = jnp.concatenate([x_ref[n] for n in range(Nb)], axis=1)

    # conv1: 1x1 conv == channel matmul, + bias, ReLU  (ONE dot, Nb*L lanes)
    h = jnp.dot(w1, x_wide, preferred_element_type=jnp.float32) + b1
    h = jnp.maximum(h, 0.0)

    # conv2: kernel=3, pad=1 -> ONE fused K=3C matmul on [h_{l-1}; h; h_{l+1}]
    h_m1 = pltpu.roll(h, shift=1, axis=1) * keep_l       # tap at l-1
    h_p1 = pltpu.roll(h, shift=W - 1, axis=1) * keep_r   # tap at l+1 (non-neg shift)
    stacked = jnp.concatenate([h_m1, h, h_p1], axis=0)   # (3C, W)
    out = jnp.dot(w2f, stacked, preferred_element_type=jnp.float32) + b2
    out = jnp.maximum(out, 0.0)

    # residual add, then write back per-n 128-aligned static lane slices
    res = (out + x_wide).astype(o_ref.dtype)
    for n in range(Nb):
        o_ref[n] = res[:, n * L:(n + 1) * L]


def block_forward(x, w1, b1, w2, b2):
    """x: (N, C, L) f32; w1: (C, C); b1: (C, 1); w2: (3, C, C) tap-major; b2: (C, 1)."""
    N, C, L = x.shape
    # Fuse the three conv2 taps into a single (C, 3C) weight so the kernel
    # runs one K=3C matmul instead of 3 K=C matmuls + 2 full-tile adds.
    # (Integration note: PyTorch Conv1d stores weight as (C_out, C_in, 3);
    #  callers must pass it here tap-major as (3, C_out, C_in).)
    w2f = jnp.concatenate([w2[0], w2[1], w2[2]], axis=1)        # (C, 3C)

    nb = _pick_batch_block(N, C, L)
    n_pad = (-N) % nb
    x_in = jnp.pad(x, ((0, n_pad), (0, 0), (0, 0))) if n_pad else x
    Np = N + n_pad
    grid = (Np // nb,)

    # VMEM budget: x + out, double buffered, plus resident weights/biases and
    # headroom. Clamped to 48 MiB so it stays legal on v7x (64 MiB physical)
    # while still lifting v5e's 16 MiB default scoped limit.
    block_bytes = nb * C * L * x.dtype.itemsize
    vmem_budget = int(min(48 * 1024 * 1024,
                          max(16 * 1024 * 1024, 6 * block_bytes + (1 << 20))))

    out = pl.pallas_call(
        block_kernel,
        out_shape=jax.ShapeDtypeStruct((Np, C, L), x.dtype),
        grid_spec=pltpu.PrefetchScalarGridSpec(
            num_scalar_prefetch=0,
            grid=grid,
            in_specs=[
                pl.BlockSpec((nb, C, L), lambda i: (i, 0, 0)),   # x
                pl.BlockSpec((C, C),     lambda i: (0, 0)),      # w1
                pl.BlockSpec((C, 1),     lambda i: (0, 0)),      # b1
                pl.BlockSpec((C, 3 * C), lambda i: (0, 0)),      # fused conv2 weight
                pl.BlockSpec((C, 1),     lambda i: (0, 0)),      # b2
            ],
            out_specs=pl.BlockSpec((nb, C, L), lambda i: (i, 0, 0)),
        ),
        compiler_params=pltpu.CompilerParams(
            dimension_semantics=("parallel",),
            vmem_limit_bytes=vmem_budget),
    )(x_in, w1, b1, w2f, b2)

    return out[:N] if n_pad else out


def block_reference(x, w1, b1, w2, b2):
    """Pure-JAX reference mirroring the PyTorch module (NCL layout)."""
    # conv1: kernel 1
    h = jnp.einsum("oc,ncl->nol", w1, x) + b1[None, :, :]
    h = jnp.maximum(h, 0.0)
    # conv2: kernel 3, padding 1 (zero pad)
    hp = jnp.pad(h, ((0, 0), (0, 0), (1, 1)))
    out = (jnp.einsum("oc,ncl->nol", w2[0], hp[:, :, :-2])
           + jnp.einsum("oc,ncl->nol", w2[1], hp[:, :, 1:-1])
           + jnp.einsum("oc,ncl->nol", w2[2], hp[:, :, 2:])
           + b2[None, :, :])
    out = jnp.maximum(out, 0.0)
    return out + x


if __name__ == "__main__":
    N, C, L = 2, 8, 128   # batch, channels (ni), sequence length

    key = jax.random.PRNGKey(0)
    kx, k1, k2, k3, k4 = jax.random.split(key, 5)

    x = jax.random.normal(kx, (N, C, L), dtype=jnp.float32)
    # Conv1d(ni, ni, 1):  weight (C, C, 1) -> (C, C), bias (C,) -> (C, 1)
    w1 = jax.random.normal(k1, (C, C), dtype=jnp.float32) * 0.1
    b1 = jax.random.normal(k2, (C, 1), dtype=jnp.float32) * 0.1
    # Conv1d(ni, ni, 3, 1, 1): weight (C, C, 3) stored here tap-major (3, C, C)
    w2 = jax.random.normal(k3, (3, C, C), dtype=jnp.float32) * 0.1
    b2 = jax.random.normal(k4, (C, 1), dtype=jnp.float32) * 0.1

    out = jax.block_until_ready(block_forward(x, w1, b1, w2, b2))
    ref = jax.block_until_ready(block_reference(x, w1, b1, w2, b2))

    assert out.shape == (N, C, L)
    assert jnp.allclose(out, ref, atol=1e-5, rtol=1e-5), "mismatch vs reference"
    print("KERNEL_OK")
</pallas_src>

<mosaic_0001>
module attributes {stable_mosaic.version = 11 : i64} {
  func.func @block_kernel(%arg0: i32, %arg1: memref<2x8x128xf32, #tpu.memory_space<vmem>>, %arg2: memref<8x8xf32, #tpu.memory_space<vmem>>, %arg3: memref<8x1xf32, #tpu.memory_space<vmem>>, %arg4: memref<8x24xf32, #tpu.memory_space<vmem>>, %arg5: memref<8x1xf32, #tpu.memory_space<vmem>>, %arg6: memref<2x8x128xf32, #tpu.memory_space<vmem>>) attributes {dimension_semantics = [#tpu.dimension_semantics<parallel>], iteration_bounds = array<i64: 1>, scalar_prefetch = 0 : i64, scratch_operands = 0 : i64, tpu.core_type = #tpu.core_type<tc>, window_params = [{transform_indices = @transform_0, window_bounds = array<i64: 2, 8, 128>}, {pipeline_mode = #tpu.pipeline_mode<synchronous>, transform_indices = @transform_1, window_bounds = array<i64: 8, 8>}, {pipeline_mode = #tpu.pipeline_mode<synchronous>, transform_indices = @transform_2, window_bounds = array<i64: 8, 1>}, {pipeline_mode = #tpu.pipeline_mode<synchronous>, transform_indices = @transform_3, window_bounds = array<i64: 8, 24>}, {pipeline_mode = #tpu.pipeline_mode<synchronous>, transform_indices = @transform_4, window_bounds = array<i64: 8, 1>}, {transform_indices = @transform_5, window_bounds = array<i64: 2, 8, 128>}]} {
    %c0 = arith.constant 0 : index
    %c0_0 = arith.constant 0 : index
    %0 = vector.load %arg2[%c0, %c0_0] : memref<8x8xf32, #tpu.memory_space<vmem>>, vector<8x8xf32>
    %c0_1 = arith.constant 0 : index
    %c0_2 = arith.constant 0 : index
    %1 = vector.load %arg4[%c0_1, %c0_2] : memref<8x24xf32, #tpu.memory_space<vmem>>, vector<8x24xf32>
    %c0_3 = arith.constant 0 : index
    %c0_4 = arith.constant 0 : index
    %2 = vector.load %arg3[%c0_3, %c0_4] : memref<8x1xf32, #tpu.memory_space<vmem>>, vector<8x1xf32>
    %3 = vector.shape_cast %2 : vector<8x1xf32> to vector<8x1xf32>
    %4 = vector.broadcast %3 : vector<8x1xf32> to vector<8x256xf32>
    %c0_5 = arith.constant 0 : index
    %c0_6 = arith.constant 0 : index
    %5 = vector.load %arg5[%c0_5, %c0_6] : memref<8x1xf32, #tpu.memory_space<vmem>>, vector<8x1xf32>
    %6 = vector.shape_cast %5 : vector<8x1xf32> to vector<8x1xf32>
    %7 = vector.broadcast %6 : vector<8x1xf32> to vector<8x256xf32>
    %8 = tpu.iota {dimensions = array<i32: 1>} : vector<1x256xi32>
    %c128_i32 = arith.constant 128 : i32
    %c0_i32 = arith.constant 0 : i32
    %9 = arith.cmpi eq, %c128_i32, %c0_i32 : i32
    %c1_i32 = arith.constant 1 : i32
    %10 = arith.select %9, %c1_i32, %c128_i32 : i32
    %11 = vector.broadcast %10 : i32 to vector<1x256xi32>
    %12 = arith.remsi %8, %11 : vector<1x256xi32>
    %c0_i32_7 = arith.constant 0 : i32
    %13 = vector.broadcast %c0_i32_7 : i32 to vector<1x256xi32>
    %14 = arith.cmpi ne, %12, %13 : vector<1x256xi32>
    %c0_i32_8 = arith.constant 0 : i32
    %15 = vector.broadcast %c0_i32_8 : i32 to vector<1x256xi32>
    %16 = arith.cmpi slt, %12, %15 : vector<1x256xi32>
    %c0_i32_9 = arith.constant 0 : i32
    %17 = arith.cmpi slt, %10, %c0_i32_9 : i32
    %18 = vector.broadcast %17 : i1 to vector<1x256xi1>
    %19 = vector.broadcast %18 : vector<1x256xi1> to vector<1x256xi1>
    %20 = arith.xori %16, %19 : vector<1x256xi1>
    %21 = arith.andi %20, %14 : vector<1x256xi1>
    %22 = vector.broadcast %10 : i32 to vector<1x256xi32>
    %23 = arith.addi %12, %22 : vector<1x256xi32>
    %24 = arith.select %21, %23, %12 : vector<1x256xi1>, vector<1x256xi32>
    %c0_i32_10 = arith.constant 0 : i32
    %25 = vector.broadcast %c0_i32_10 : i32 to vector<1x256xi32>
    %26 = arith.cmpi sgt, %24, %25 : vector<1x256xi32>
    %27 = arith.extui %26 : vector<1x256xi1> to vector<1x256xi32>
    %28 = arith.sitofp %27 : vector<1x256xi32> to vector<1x256xf32>
    %c127_i32 = arith.constant 127 : i32
    %29 = vector.broadcast %c127_i32 : i32 to vector<1x256xi32>
    %30 = arith.cmpi slt, %24, %29 : vector<1x256xi32>
    %31 = arith.extui %30 : vector<1x256xi1> to vector<1x256xi32>
    %32 = arith.sitofp %31 : vector<1x256xi32> to vector<1x256xf32>
    %c0_11 = arith.constant 0 : index
    %c0_12 = arith.constant 0 : index
    %c0_13 = arith.constant 0 : index
    %33 = vector.load %arg1[%c0_11, %c0_12, %c0_13] : memref<2x8x128xf32, #tpu.memory_space<vmem>>, vector<1x8x128xf32>
    %34 = vector.shape_cast %33 : vector<1x8x128xf32> to vector<8x128xf32>
    %c1 = arith.constant 1 : index
    %c0_14 = arith.constant 0 : index
    %c0_15 = arith.constant 0 : index
    %35 = vector.load %arg1[%c1, %c0_14, %c0_15] : memref<2x8x128xf32, #tpu.memory_space<vmem>>, vector<1x8x128xf32>
    %36 = vector.shape_cast %35 : vector<1x8x128xf32> to vector<8x128xf32>
    %37 = tpu.concatenate %34, %36 in 1 : vector<8x128xf32>, vector<8x128xf32> -> vector<8x256xf32>
    %cst = arith.constant dense<0.000000e+00> : vector<8x256xf32>
    %38 = tpu.matmul %0, %37, %cst {dimension_numbers = #tpu.dot_dimension_numbers<[1], [0], [0], [1], [0, 0, 1, 1], [], []>} : vector<8x8xf32>, vector<8x256xf32>, vector<8x256xf32> -> vector<8x256xf32>
    %39 = arith.addf %38, %4 : vector<8x256xf32>
    %cst_16 = arith.constant 0.000000e+00 : f32
    %40 = vector.broadcast %cst_16 : f32 to vector<8x256xf32>
    %41 = arith.maximumf %39, %40 : vector<8x256xf32>
    %c1_i32_17 = arith.constant 1 : i32
    %42 = tpu.dynamic_rotate %41 by %c1_i32_17 dim 1 : vector<8x256xf32>, i32 -> vector<8x256xf32>
    %43 = vector.broadcast %28 : vector<1x256xf32> to vector<8x256xf32>
    %44 = arith.mulf %42, %43 : vector<8x256xf32>
    %c255_i32 = arith.constant 255 : i32
    %45 = tpu.dynamic_rotate %41 by %c255_i32 dim 1 : vector<8x256xf32>, i32 -> vector<8x256xf32>
    %46 = vector.broadcast %32 : vector<1x256xf32> to vector<8x256xf32>
    %47 = arith.mulf %45, %46 : vector<8x256xf32>
    %48 = tpu.concatenate %44, %41, %47 in 0 : vector<8x256xf32>, vector<8x256xf32>, vector<8x256xf32> -> vector<24x256xf32>
    %cst_18 = arith.constant dense<0.000000e+00> : vector<8x256xf32>
    %49 = tpu.matmul %1, %48, %cst_18 {dimension_numbers = #tpu.dot_dimension_numbers<[1], [0], [0], [1], [0, 0, 1, 1], [], []>} : vector<8x24xf32>, vector<24x256xf32>, vector<8x256xf32> -> vector<8x256xf32>
    %50 = arith.addf %49, %7 : vector<8x256xf32>
    %cst_19 = arith.constant 0.000000e+00 : f32
    %51 = vector.broadcast %cst_19 : f32 to vector<8x256xf32>
    %52 = arith.maximumf %50, %51 : vector<8x256xf32>
    %53 = arith.addf %52, %37 : vector<8x256xf32>
    %54 = vector.extract_strided_slice %53 {offsets = [0, 0], sizes = [8, 128], strides = [1, 1]} : vector<8x256xf32> to vector<8x128xf32>
    %c0_20 = arith.constant 0 : index
    %c0_21 = arith.constant 0 : index
    %c0_22 = arith.constant 0 : index
    %55 = vector.load %arg6[%c0_20, %c0_21, %c0_22] : memref<2x8x128xf32, #tpu.memory_space<vmem>>, vector<1x8x128xf32>
    %56 = vector.shape_cast %55 : vector<1x8x128xf32> to vector<8x128xf32>
    %57 = vector.shape_cast %54 : vector<8x128xf32> to vector<1x8x128xf32>
    tpu.vector_store %arg6[%c0_20, %c0_21, %c0_22], %57 {strides = array<i32>} : memref<2x8x128xf32, #tpu.memory_space<vmem>>, vector<1x8x128xf32>,
    %58 = vector.extract_strided_slice %53 {offsets = [0, 128], sizes = [8, 128], strides = [1, 1]} : vector<8x256xf32> to vector<8x128xf32>
    %c1_23 = arith.constant 1 : index
    %c0_24 = arith.constant 0 : index
    %c0_25 = arith.constant 0 : index
    %59 = vector.load %arg6[%c1_23, %c0_24, %c0_25] : memref<2x8x128xf32, #tpu.memory_space<vmem>>, vector<1x8x128xf32>
    %60 = vector.shape_cast %59 : vector<1x8x128xf32> to vector<8x128xf32>
    %61 = vector.shape_cast %58 : vector<8x128xf32> to vector<1x8x128xf32>
    tpu.vector_store %arg6[%c1_23, %c0_24, %c0_25], %61 {strides = array<i32>} : memref<2x8x128xf32, #tpu.memory_space<vmem>>, vector<1x8x128xf32>,
    return
  }
  func.func @transform_0(%arg0: i32) -> (i32, i32, i32) {
    %c0_i32 = arith.constant 0 : i32
    %c0_i32_0 = arith.constant 0 : i32
    %c0_i32_1 = arith.constant 0 : i32
    return %arg0, %c0_i32, %c0_i32_0 : i32, i32, i32
  }
  func.func @transform_1(%arg0: i32) -> (i32, i32) {
    %c0_i32 = arith.constant 0 : i32
    %c0_i32_0 = arith.constant 0 : i32
    %c0_i32_1 = arith.constant 0 : i32
    return %c0_i32, %c0_i32_0 : i32, i32
  }
  func.func @transform_2(%arg0: i32) -> (i32, i32) {
    %c0_i32 = arith.constant 0 : i32
    %c0_i32_0 = arith.constant 0 : i32
    %c0_i32_1 = arith.constant 0 : i32
    return %c0_i32, %c0_i32_0 : i32, i32
  }
  func.func @transform_3(%arg0: i32) -> (i32, i32) {
    %c0_i32 = arith.constant 0 : i32
    %c0_i32_0 = arith.constant 0 : i32
    %c0_i32_1 = arith.constant 0 : i32
    return %c0_i32, %c0_i32_0 : i32, i32
  }
  func.func @transform_4(%arg0: i32) -> (i32, i32) {
    %c0_i32 = arith.constant 0 : i32
    %c0_i32_0 = arith.constant 0 : i32
    %c0_i32_1 = arith.constant 0 : i32
    return %c0_i32, %c0_i32_0 : i32, i32
  }
  func.func @transform_5(%arg0: i32) -> (i32, i32, i32) {
    %c0_i32 = arith.constant 0 : i32
    %c0_i32_0 = arith.constant 0 : i32
    %c0_i32_1 = arith.constant 0 : i32
    return %arg0, %c0_i32, %c0_i32_0 : i32, i32, i32
  }
}

</mosaic_0001>

<llo_original>
// kernel: tpu_custom_call.1
$region0: #{tpu_custom_call.1}
  #allocation0 [shape = 'u32[]', space=smem, size = 0x4, offset = 0x4, fixed_abs, tag = 'smem constant byte address 0x4 - core index']
  #allocation1 [shape = 'u32[144,128]{1,0:T(1,128)}', space=vmem, size = 0x12000, scoped, tag = 'internal scratch']
  %s0 = inlined_call_operand.vmem [shape: f32[2,8,128], index: 0, kind: input, shape index: {}]
  %s1 = inlined_call_operand.hbm [shape: f32[8,8], index: 1, kind: input, shape index: {}]
  %s2 = inlined_call_operand.vmem [shape: f32[8,1], index: 2, kind: input, shape index: {}]
  %s3 = inlined_call_operand.vmem [shape: f32[8,24], index: 3, kind: input, shape index: {}]
  %s4 = inlined_call_operand.vmem [shape: f32[8,1], index: 4, kind: input, shape index: {}]
  %s5 = inlined_call_operand.hbm [shape: f32[2,8,128], index: 5, kind: output, shape index: {}]
  %s6 = sld [smem:[#allocation0]]
  $region34: #{tpu_custom_call.1} parent=0
    _
  %s8 = ssub.s32 1, %s6
  %s9 = scalar_select 0, %s8, %s6
  $region1: #{tpu_custom_call.1} parent=0
    #allocation2 [shape = 'u8[4096]{0}', space=vmem, size = 0x1000, scoped, tag = 'input window, operand 1, single buffered']
    #allocation3 [shape = 's32[1]{0}', space=sflag, size = 0x4, scoped, tag = 'scoped memory for tpu_custom_call.1']
    #allocation4 [shape = 's32[1]{0}', space=sflag, size = 0x4, scoped, tag = 'scoped memory for tpu_custom_call.1']
    #allocation5 [shape = 'u8[8192]{0}', space=vmem, size = 0x2000, scoped, tag = 'output window, operand 0, single buffered']
    %10 = vsyncpa [#allocation3], 0
    %11 = vsyncpa [#allocation4], 0
    // Predicated region
    $region2: #{tpu_custom_call.1} parent=1 // pred_check
      _
    $region3: #{tpu_custom_call.1} parent=1 // pred_check_branch
      %13 = sbr.rel (0) target = $region5
    $region4: #{tpu_custom_call.1} parent=1 // pred_region
      _
    $region5: #{tpu_custom_call.1} parent=1 // pred_fallthru
      _
    // Predicated region
    $region6: #{tpu_custom_call.1} parent=1 // pred_check
      _
    $region7: #{tpu_custom_call.1} parent=1 // pred_check_branch
      %15 = sbr.rel (0) target = $region9
    $region8: #{tpu_custom_call.1} parent=1 // pred_region
      %s17 = ssub.s32 128, 128
      %18 = vsyncadd [#allocation3], %s17
      %s20 = sshll.u32 [#allocation2], 4
      %s21 = int_to_ptr.vmem [resolvable:$true] %s20
      %23 = dma.hbm_to_vmem [thread:$0]  %s1, 128, %s21, [#allocation3]
    $region9: #{tpu_custom_call.1} parent=1 // pred_fallthru
      _
    // Predicated region
    $region10: #{tpu_custom_call.1} parent=1 // pred_check
      _
    $region11: #{tpu_custom_call.1} parent=1 // pred_check_branch
      %25 = sbr.rel (0) target = $region13
    $region12: #{tpu_custom_call.1} parent=1 // pred_region
      _
    $region13: #{tpu_custom_call.1} parent=1 // pred_fallthru
      _
    // Predicated region
    $region14: #{tpu_custom_call.1} parent=1 // pred_check
      _
    $region15: #{tpu_custom_call.1} parent=1 // pred_check_branch
      %27 = sbr.rel (0) target = $region17
    $region16: #{tpu_custom_call.1} parent=1 // pred_region
      _
    $region17: #{tpu_custom_call.1} parent=1 // pred_fallthru
      _
    // Predicated region
    $region18: #{tpu_custom_call.1} parent=1 // pred_check
      _
    $region19: #{tpu_custom_call.1} parent=1 // pred_check_branch
      %29 = sbr.rel (0) target = $region21
    $region20: #{tpu_custom_call.1} parent=1 // pred_region
      _
    $region21: #{tpu_custom_call.1} parent=1 // pred_fallthru
      _
    // Predicated region
    $region22: #{tpu_custom_call.1} parent=1 // pred_check
      _
    $region23: #{tpu_custom_call.1} parent=1 // pred_check_branch
      %31 = sbr.rel (0) target = $region25
    $region24: #{tpu_custom_call.1} parent=1 // pred_region
      %32 = dma.done [#allocation3], 128
    $region25: #{tpu_custom_call.1} parent=1 // pred_fallthru
      _
    %v33 = vld [vmem:[#allocation2] sm:$0xff]
    %v34 = vld [vmem:[%s3] sm:$0xff]
    %v35 = vld [vmem:[%s2] sm:$0xff]
    %37 = vset.pattern.permute.xlu0 0
    %38 = vperm.xlu0 %37, %v35
    %v39 = vpop.permute.xlu0 %38
    %v41 = vld [vmem:[%s4] sm:$0xff]
    %43 = vset.pattern.permute.xlu0 0
    %44 = vperm.xlu0 %43, %v41
    %v45 = vpop.permute.xlu0 %44
    %v47 = vlaneseq
    %v48 = vand.u32 %v47, 127
    %v49 = vadd.s32 %v48, 128
    %vm50 = vcmp.lt.s32.totalorder %v48, 0
    %v51 = vsub.s32 0, %v48
    %v52 = vsel %vm50, %v51, %v48
    %v53 = vshrl.u32 %v52, 7
    %v54 = vand.u32 %v52, 127
    %v55 = vsub.s32 0, %v54
    %v56 = vsel %vm50, %v55, %v54
    %vm57 = vcmp.lt.s32.totalorder %v49, 0
    %v58 = vsub.s32 0, %v49
    %v59 = vsel %vm57, %v58, %v49
    %v60 = vshrl.u32 %v59, 7
    %v61 = vand.u32 %v59, 127
    %v62 = vsub.s32 0, %v61
    %v63 = vsel %vm57, %v62, %v61
    %vm64 = vcmp.ne.s32.totalorder %v56, 0
    %vm65 = vcmp.ne.s32.totalorder %v63, 0
    %vm66 = vcmp.lt.s32.totalorder %v56, 0
    %vm67 = vcmp.lt.s32.totalorder %v63, 0
    %vm68 = vmand %vm66, %vm64
    %vm69 = vmand %vm67, %vm65
    %v70 = vadd.s32 %v56, 128
    %v71 = vadd.s32 %v63, 128
    %v72 = vsel %vm68, %v70, %v56
    %v73 = vsel %vm69, %v71, %v63
    %vm74 = vcmp.gt.s32.totalorder %v72, 0
    %vm75 = vcmp.gt.s32.totalorder %v73, 0
    %v76 = vsel %vm74, 1, 0
    %v77 = vsel %vm75, 1, 0
    %v78 = vcvt.s32.f32 %v76
    %v79 = vcvt.s32.f32 %v77
    %vm80 = vcmp.lt.s32.totalorder %v72, 127
    %vm81 = vcmp.lt.s32.totalorder %v73, 127
    %v82 = vsel %vm80, 1, 0
    %v83 = vsel %vm81, 1, 0
    %v84 = vcvt.s32.f32 %v82
    %v85 = vcvt.s32.f32 %v83
    %v86 = vld [vmem:[%s0] sm:$0xff]
    %s87 = scalar_lea.vmem %s0, 8
    %v88 = vld [vmem:[%s87] sm:$0xff]
    %vm89 = vcmask 64512
    %v91 = vsel %vm89, %v33, 0
    %93 = vmatprep.subr.mxu0 %v88
    %94 = vmatpush1.msra.mxu0 %v86
    %95 = vmatprep.subr.mxu0 0.0
    %96 = vmatpush1.msra.mxu0 0.0
    %97 = vmatprep.subr.mxu0 0.0
    %98 = vmatpush1.msra.mxu0 0.0
    %99 = vmatprep.subr.mxu0 0.0
    %100 = vmatpush1.msra.mxu0 0.0
    %101 = vmatprep.subr.mxu0 0.0
    %102 = vmatpush1.msra.mxu0 0.0
    %103 = vmatprep.subr.mxu0 0.0
    %104 = vmatpush1.msra.mxu0 0.0
    %105 = vmatprep.subr.mxu0 0.0
    %106 = vmatpush1.msra.mxu0 0.0
    %107 = vmatprep.subr.mxu0 0.0
    %108 = vmatpush1.msra.mxu0 0.0
    %109 = vmatprep.subr.mxu0 0.0
    %110 = vmatpush1.msra.mxu0 0.0
    %111 = vmatprep.subr.mxu0 0.0
    %112 = vmatpush1.msra.mxu0 0.0
    %113 = vmatprep.subr.mxu0 0.0
    %114 = vmatpush1.msra.mxu0 0.0
    %115 = vmatprep.subr.mxu0 0.0
    %116 = vmatpush1.msra.mxu0 0.0
    %117 = vmatprep.subr.mxu0 0.0
    %118 = vmatpush1.msra.mxu0 0.0
    %119 = vmatprep.subr.mxu0 0.0
    %120 = vmatpush1.msra.mxu0 0.0
    %121 = vmatprep.subr.mxu0 0.0
    %122 = vmatpush1.msra.mxu0 0.0
    %123 = vmatprep.subr.mxu0 0.0
    %124 = vmatpush1.msra.mxu0 0.0
    %125 = vmatprep.subr.mxu0 0.0
    %126 = vmatpush1.msra.mxu0 0.0
    %127 = vmatprep.subr.mxu0 0.0
    %128 = vmatpush1.msra.mxu0 0.0
    %129 = vmatprep.subr.mxu0 0.0
    %130 = vmatpush1.msra.mxu0 0.0
    %131 = vmatprep.subr.mxu0 0.0
    %132 = vmatpush1.msra.mxu0 0.0
    %133 = vmatprep.subr.mxu0 0.0
    %134 = vmatpush1.msra.mxu0 0.0
    %135 = vmatprep.subr.mxu0 0.0
    %136 = vmatpush1.msra.mxu0 0.0
    %137 = vmatprep.subr.mxu0 0.0
    %138 = vmatpush1.msra.mxu0 0.0
    %139 = vmatprep.subr.mxu0 0.0
    %140 = vmatpush1.msra.mxu0 0.0
    %141 = vmatprep.subr.mxu0 0.0
    %142 = vmatpush1.msra.mxu0 0.0
    %143 = vmatprep.subr.mxu0 0.0
    %144 = vmatpush1.msra.mxu0 0.0
    %145 = vmatprep.subr.mxu0 0.0
    %146 = vmatpush1.msra.mxu0 0.0
    %147 = vmatprep.subr.mxu0 0.0
    %148 = vmatpush1.msra.mxu0 0.0
    %149 = vmatprep.subr.mxu0 0.0
    %150 = vmatpush1.msra.mxu0 0.0
    %151 = vmatprep.subr.mxu0 0.0
    %152 = vmatpush1.msra.mxu0 0.0
    %153 = vmatprep.subr.mxu0 0.0
    %154 = vmatpush1.msra.mxu0 0.0
    %155 = vmatprep.subr.mxu0 0.0
    %156 = vmatpush1.msra.mxu0 0.0
    %157 = vmatprep.mubr.f32.mxu0 0.0
    %158 = vmatmul.mubr.f32.gmra.mrb[0].mxu0 %v91
    %v159 = vpop.f32.mrb[0].mxu0
    %v160 = vadd.f32 %v39, %v159
    %v161 = vpop.f32.mrb[0].mxu0
    %v162 = vadd.f32 %v39, %v161
    %163 = vdwg.mxu0
    %v164 = vmax.f32 %v160, 0.0
    %v165 = vmax.f32 %v162, 0.0
    %166 = vrot.lane.b32.xlu0 %v164, 1
    %v167 = vpop.permute.xlu0 %166
    %168 = vrot.lane.b32.xlu0 %v165, 1
    %v169 = vpop.permute.xlu0 %168
    %vm170 = vcmp.lt.s32.totalorder %v48, 1
    %v171 = vsel %vm170, %v167, %v169
    %v172 = vsel %vm170, %v169, %v167
    %v173 = vmul.f32 %v172, %v78
    %v174 = vmul.f32 %v171, %v79
    %175 = vrot.lane.b32.xlu0 %v164, 127
    %v176 = vpop.permute.xlu0 %175
    %177 = vrot.lane.b32.xlu0 %v165, 127
    %v178 = vpop.permute.xlu0 %177
    %vm179 = vcmp.lt.s32.totalorder %v48, 127
    %v180 = vsel %vm179, %v176, %v178
    %v181 = vsel %vm179, %v178, %v176
    %v182 = vmul.f32 %v180, %v84
    %v183 = vmul.f32 %v181, %v85
    %vm184 = vcmask 195584
    %v186 = vsel %vm184, %v34, 0
    %188 = vmatprep.subr.mxu0 %v174
    %189 = vmatpush1.msra.mxu0 %v173
    %190 = vmatprep.subr.mxu0 %v165
    %191 = vmatpush1.msra.mxu0 %v164
    %192 = vmatprep.subr.mxu0 %v183
    %193 = vmatpush1.msra.mxu0 %v182
    %194 = vmatprep.subr.mxu0 0.0
    %195 = vmatpush1.msra.mxu0 0.0
    %196 = vmatprep.subr.mxu0 0.0
    %197 = vmatpush1.msra.mxu0 0.0
    %198 = vmatprep.subr.mxu0 0.0
    %199 = vmatpush1.msra.mxu0 0.0
    %200 = vmatprep.subr.mxu0 0.0
    %201 = vmatpush1.msra.mxu0 0.0
    %202 = vmatprep.subr.mxu0 0.0
    %203 = vmatpush1.msra.mxu0 0.0
    %204 = vmatprep.subr.mxu0 0.0
    %205 = vmatpush1.msra.mxu0 0.0
    %206 = vmatprep.subr.mxu0 0.0
    %207 = vmatpush1.msra.mxu0 0.0
    %208 = vmatprep.subr.mxu0 0.0
    %209 = vmatpush1.msra.mxu0 0.0
    %210 = vmatprep.subr.mxu0 0.0
    %211 = vmatpush1.msra.mxu0 0.0
    %212 = vmatprep.subr.mxu0 0.0
    %213 = vmatpush1.msra.mxu0 0.0
    %214 = vmatprep.subr.mxu0 0.0
    %215 = vmatpush1.msra.mxu0 0.0
    %216 = vmatprep.subr.mxu0 0.0
    %217 = vmatpush1.msra.mxu0 0.0
    %218 = vmatprep.subr.mxu0 0.0
    %219 = vmatpush1.msra.mxu0 0.0
    %220 = vmatprep.subr.mxu0 0.0
    %221 = vmatpush1.msra.mxu0 0.0
    %222 = vmatprep.subr.mxu0 0.0
    %223 = vmatpush1.msra.mxu0 0.0
    %224 = vmatprep.subr.mxu0 0.0
    %225 = vmatpush1.msra.mxu0 0.0
    %226 = vmatprep.subr.mxu0 0.0
    %227 = vmatpush1.msra.mxu0 0.0
    %228 = vmatprep.subr.mxu0 0.0
    %229 = vmatpush1.msra.mxu0 0.0
    %230 = vmatprep.subr.mxu0 0.0
    %231 = vmatpush1.msra.mxu0 0.0
    %232 = vmatprep.subr.mxu0 0.0
    %233 = vmatpush1.msra.mxu0 0.0
    %234 = vmatprep.subr.mxu0 0.0
    %235 = vmatpush1.msra.mxu0 0.0
    %236 = vmatprep.subr.mxu0 0.0
    %237 = vmatpush1.msra.mxu0 0.0
    %238 = vmatprep.subr.mxu0 0.0
    %239 = vmatpush1.msra.mxu0 0.0
    %240 = vmatprep.subr.mxu0 0.0
    %241 = vmatpush1.msra.mxu0 0.0
    %242 = vmatprep.subr.mxu0 0.0
    %243 = vmatpush1.msra.mxu0 0.0
    %244 = vmatprep.subr.mxu0 0.0
    %245 = vmatpush1.msra.mxu0 0.0
    %246 = vmatprep.subr.mxu0 0.0
    %247 = vmatpush1.msra.mxu0 0.0
    %248 = vmatprep.subr.mxu0 0.0
    %249 = vmatpush1.msra.mxu0 0.0
    %250 = vmatprep.subr.mxu0 0.0
    %251 = vmatpush1.msra.mxu0 0.0
    %252 = vmatprep.mubr.f32.mxu0 0.0
    %253 = vmatmul.mubr.f32.gmra.mrb[0].mxu0 %v186
    %v254 = vpop.f32.mrb[0].mxu0
    %v255 = vadd.f32 %v45, %v254
    %v256 = vpop.f32.mrb[0].mxu0
    %v257 = vadd.f32 %v45, %v256
    %258 = vdwg.mxu0
    %v259 = vmax.f32 %v255, 0.0
    %v260 = vmax.f32 %v257, 0.0
    %v261 = vadd.f32 %v259, %v86
    %v262 = vadd.f32 %v260, %v88
    %263 = vst [vmem:[#allocation5] sm:$0xff] %v261
    %s264 = scalar_lea.vmem [#allocation5], 8
    %265 = vst [vmem:[%s264] sm:$0xff] %v262
    // Predicated region
    $region26: #{tpu_custom_call.1} parent=1 // pred_check
      _
    $region27: #{tpu_custom_call.1} parent=1 // pred_check_branch
      %267 = sbr.rel (0) target = $region29
    $region28: #{tpu_custom_call.1} parent=1 // pred_region
      %s269 = ssub.s32 256, 256
      %270 = vsyncadd [#allocation4], %s269
      %s271 = sshll.u32 [#allocation5], 4
      %s272 = int_to_ptr.vmem [resolvable:$true] %s271
      %277 = dma.vmem_to_hbm [thread:$0]  %s272, 256, %s5, [#allocation4], 128, 128, 8
    $region29: #{tpu_custom_call.1} parent=1 // pred_fallthru
      _
    // Predicated region
    $region30: #{tpu_custom_call.1} parent=1 // pred_check
      _
    $region31: #{tpu_custom_call.1} parent=1 // pred_check_branch
      %279 = sbr.rel (0) target = $region33
    $region32: #{tpu_custom_call.1} parent=1 // pred_region
      %280 = dma.done [#allocation4], 256
    $region33: #{tpu_custom_call.1} parent=1 // pred_fallthru
      _
    %281 = vsyncpa [#allocation3], 1
    %282 = vsyncpa [#allocation4], 1

</llo_original>
